<compile_context>
chip_gen: v7x
topology: tpu7x:2x2x1
jax: 0.10.0
libtpu: 0.0.40
codegen_flags: <defaults>
</compile_context>

<pallas_src>
import functools
import math

import jax
import jax.numpy as jnp
from jax.experimental import pallas as pl
from jax.experimental.pallas import tpu as pltpu

_MXU_DTYPE = jnp.float32  # set to jnp.bfloat16 for bf16-native MXU inputs
_SMEM_SPEC = pl.BlockSpec(memory_space=pltpu.MemorySpace.SMEM)
_PARALLEL = pltpu.CompilerParams(dimension_semantics=("parallel",))


def _row_tile(rows, cap=256):
    """Largest row tile <= cap that divides `rows` (multiple of 8), else full rows."""
    if rows <= cap:
        return rows
    t = (cap // 8) * 8
    while t >= 8:
        if rows % t == 0:
            return t
        t -= 8
    return rows


def _dot(a, b):
    return jnp.dot(a.astype(_MXU_DTYPE), b.astype(_MXU_DTYPE),
                   preferred_element_type=jnp.float32)


# ---------------------------------------------------------------------------
# Generic row-tiled linear (used for fused kqv projection and stacked predict)
# ---------------------------------------------------------------------------
def _linear_kernel(x_ref, w_ref, b_ref, o_ref, *, scale, activation):
    x = x_ref[...]
    if scale != 1.0:
        x = x * scale
    y = _dot(x, w_ref[...]) + b_ref[...]
    if activation == "tanh":
        y = jnp.tanh(y)
    o_ref[...] = y


def linear_pallas(x, w, b, *, scale=1.0, activation=None, row_cap=512):
    m, din = x.shape
    dout = w.shape[1]
    tm = _row_tile(m, row_cap)
    kern = functools.partial(_linear_kernel, scale=scale, activation=activation)
    return pl.pallas_call(
        kern,
        out_shape=jax.ShapeDtypeStruct((m, dout), jnp.float32),
        grid=(m // tm,),
        in_specs=[pl.BlockSpec((tm, din), lambda i: (i, 0)),
                  pl.BlockSpec((din, dout), lambda i: (0, 0)),
                  pl.BlockSpec((1, dout), lambda i: (0, 0))],
        out_specs=pl.BlockSpec((tm, dout), lambda i: (i, 0)),
        compiler_params=_PARALLEL,
    )(x, w, b.reshape(1, dout))


# ---------------------------------------------------------------------------
# Fused adapt: per-modality BatchNorm(eval) scale + Linear + tanh  (1 call for 3)
# ---------------------------------------------------------------------------
def _adapt_kernel(x_ref, w_ref, b_ref, o_ref, *, scale):
    for m in range(3):
        y = _dot(x_ref[m] * scale, w_ref[m]) + b_ref[m]
        o_ref[m] = jnp.tanh(y)


def adapt_pallas(x3, w3, b3, *, scale, row_cap=512):
    _, n, din = x3.shape
    dout = w3.shape[-1]
    tn = _row_tile(n, row_cap)
    return pl.pallas_call(
        functools.partial(_adapt_kernel, scale=scale),
        out_shape=jax.ShapeDtypeStruct((3, n, dout), jnp.float32),
        grid=(n // tn,),
        in_specs=[pl.BlockSpec((3, tn, din), lambda i: (0, i, 0)),
                  pl.BlockSpec((3, din, dout), lambda i: (0, 0, 0)),
                  pl.BlockSpec((3, 1, dout), lambda i: (0, 0, 0))],
        out_specs=pl.BlockSpec((3, tn, dout), lambda i: (0, i, 0)),
        compiler_params=_PARALLEL,
    )(x3, w3, b3)


# ---------------------------------------------------------------------------
# Fused per-layer kernel: cross-modal scores + relation attention/message +
# modality softmax + mailbox reduce + a_lin skip + LayerNorm.
# Per-head relation matrices enter as block-diagonal (n_hid, n_hid) operands,
# so all matmuls are n_hid-wide and all large stores are lane-dense.
# ---------------------------------------------------------------------------
def _edge_reduce_kernel(src_ref, dstq_ref, h_ref,
                        wcm_ref, watt_ref, wmsg_ref, pri_ref, hsum_ref, exp_ref,
                        aw_ref, ab_ref, g_ref, bln_ref, alpha_ref,
                        newh_ref, lam_ref, *, in_deg, n_heads, d_k):
    tn = newh_ref.shape[1]
    te = tn * in_deg
    n_hid = n_heads * d_k

    hsum = hsum_ref[...]      # (n_hid, H) head-sum indicator
    watt = watt_ref[...]      # block-diag relation_att
    wmsg = wmsg_ref[...]      # block-diag relation_msg
    pri = pri_ref[...]        # (1, H), already includes *10 / sqrt(d_k)

    cm, att, val = [], [], []
    for m in range(3):
        x = src_ref[m]                       # (te, 3*n_hid) = [k | q | v]
        sk = x[:, :n_hid]
        sv = x[:, 2 * n_hid:3 * n_hid]
        dq = dstq_ref[m]                     # (te, n_hid)
        key_cm = _dot(sk, wcm_ref[m])
        cm.append(_dot(dq * key_cm, hsum))   # (te, H)  cross-modal score
        key = _dot(sk, watt)
        att.append(_dot(dq * key, hsum) * pri)   # (te, H) relation attention
        val.append(_dot(sv, wmsg))               # (te, n_hid) lane-dense message

    # softmax over the 3 modalities -> lambda_txt / lambda_img / lambda_s
    mx = jnp.maximum(jnp.maximum(cm[0], cm[1]), cm[2])
    es = [jnp.exp(c - mx) for c in cm]
    inv = 1.0 / (es[0] + es[1] + es[2])
    lam = [e * inv for e in es]
    for m in range(3):
        lam_ref[m] = lam[m]

    # mailbox softmaxes over the in-degree axis
    def mbox(x):                      # (te, H) -> (tn, D, H)  (lane dim unchanged)
        return x.reshape(tn, in_deg, n_heads)

    def smax(x):                      # softmax over axis=1 (mailbox)
        mm = jnp.max(x, axis=1, keepdims=True)
        e = jnp.exp(x - mm)
        return e / jnp.sum(e, axis=1, keepdims=True)

    at, ai, as_ = mbox(att[0]), mbox(att[1]), mbox(att[2])
    lt, li, ls = mbox(lam[0]), mbox(lam[1]), mbox(lam[2])
    align = -(jnp.abs(at - ai) + jnp.abs(at - as_) + jnp.abs(ai - as_)) / 3.0
    beta2 = smax(align)
    beta1 = smax(at) * lt + smax(ai) * li + smax(as_) * ls
    beta = smax(beta1 * beta2)                                   # (tn, D, H)

    # expand per-head beta to lane-dense (tn, D, n_hid) weights via a tiny matmul
    beta_wide = _dot(beta.reshape(te, n_heads), exp_ref[...]).reshape(tn, in_deg, n_hid)

    alpha = alpha_ref[0, 0]
    aw, ab, g, bln = aw_ref[...], ab_ref[...], g_ref[...], bln_ref[...]
    for m in range(3):
        t = jnp.sum(beta_wide * val[m].reshape(tn, in_deg, n_hid), axis=1)  # (tn, n_hid)
        trans = _dot(t, aw) + ab
        out = trans * alpha + h_ref[m] * (1.0 - alpha)
        mu = jnp.mean(out, axis=-1, keepdims=True)
        var = jnp.mean((out - mu) ** 2, axis=-1, keepdims=True)
        newh_ref[m] = (out - mu) * jax.lax.rsqrt(var + 1e-5) * g + bln


def edge_reduce_pallas(src_kv, dst_q, h_all, wcm, watt, wmsg, pri, hsum, expand,
                       aw, ab, g, bln, alpha, *, in_deg, n_heads, d_k, node_cap=256):
    _, n, n_hid = h_all.shape
    e = src_kv.shape[1]
    assert e == n * in_deg
    tn = _row_tile(n, node_cap)
    te = tn * in_deg
    kern = functools.partial(_edge_reduce_kernel, in_deg=in_deg,
                             n_heads=n_heads, d_k=d_k)
    return pl.pallas_call(
        kern,
        out_shape=(jax.ShapeDtypeStruct((3, n, n_hid), jnp.float32),
                   jax.ShapeDtypeStruct((3, e, n_heads), jnp.float32)),
        grid=(n // tn,),
        in_specs=[
            pl.BlockSpec((3, te, 3 * n_hid), lambda i: (0, i, 0)),   # src k|q|v
            pl.BlockSpec((3, te, n_hid), lambda i: (0, i, 0)),       # dst q
            pl.BlockSpec((3, tn, n_hid), lambda i: (0, i, 0)),       # layer input h
            pl.BlockSpec((3, n_hid, n_hid), lambda i: (0, 0, 0)),    # block-diag w_m
            pl.BlockSpec((n_hid, n_hid), lambda i: (0, 0)),          # block-diag rel_att
            pl.BlockSpec((n_hid, n_hid), lambda i: (0, 0)),          # block-diag rel_msg
            pl.BlockSpec((1, n_heads), lambda i: (0, 0)),            # pri * 10 / sqrt(dk)
            pl.BlockSpec((n_hid, n_heads), lambda i: (0, 0)),        # head-sum indicator
            pl.BlockSpec((n_heads, n_hid), lambda i: (0, 0)),        # head-expand indicator
            pl.BlockSpec((n_hid, n_hid), lambda i: (0, 0)),          # a_lin w
            pl.BlockSpec((1, n_hid), lambda i: (0, 0)),              # a_lin b
            pl.BlockSpec((1, n_hid), lambda i: (0, 0)),              # LN gamma
            pl.BlockSpec((1, n_hid), lambda i: (0, 0)),              # LN beta
            _SMEM_SPEC,                                              # alpha scalar
        ],
        out_specs=(pl.BlockSpec((3, tn, n_hid), lambda i: (0, i, 0)),
                   pl.BlockSpec((3, te, n_heads), lambda i: (0, i, 0))),
        compiler_params=_PARALLEL,
    )(src_kv, dst_q, h_all, wcm, watt, wmsg, pri, hsum, expand, aw, ab, g, bln, alpha)


# ---------------------------------------------------------------------------
# Fused project(+tanh) + modality softmax + weighted pooling
# ---------------------------------------------------------------------------
def _pool_kernel(h_ref, pw_ref, pb_ref, o_ref):
    pw = pw_ref[...]                 # (1, n_hid)
    pb = pb_ref[0, 0]
    scores = []
    for m in range(3):
        s = jnp.sum(h_ref[m] * pw, axis=-1, keepdims=True) + pb   # (tn, 1)
        scores.append(jnp.tanh(s))
    mx = jnp.maximum(jnp.maximum(scores[0], scores[1]), scores[2])
    es = [jnp.exp(s - mx) for s in scores]
    inv = 1.0 / (es[0] + es[1] + es[2])
    o_ref[...] = (es[0] * h_ref[0] + es[1] * h_ref[1] + es[2] * h_ref[2]) * inv


def pool_pallas(h_all, proj_w, proj_b, *, node_cap=512):
    _, n, n_hid = h_all.shape
    tn = _row_tile(n, node_cap)
    return pl.pallas_call(
        _pool_kernel,
        out_shape=jax.ShapeDtypeStruct((n, n_hid), jnp.float32),
        grid=(n // tn,),
        in_specs=[pl.BlockSpec((3, tn, n_hid), lambda i: (0, i, 0)),
                  pl.BlockSpec((1, n_hid), lambda i: (0, 0)),
                  _SMEM_SPEC],
        out_specs=pl.BlockSpec((tn, n_hid), lambda i: (i, 0)),
        compiler_params=_PARALLEL,
    )(h_all, proj_w.reshape(1, n_hid), proj_b.reshape(1, 1))


# ---------------------------------------------------------------------------
# Parameter initialization (deterministic, synthetic)
# ---------------------------------------------------------------------------
def dense_init(key, din, dout):
    kw, kb = jax.random.split(key)
    s = 1.0 / math.sqrt(din)
    w = jax.random.uniform(kw, (din, dout), minval=-s, maxval=s, dtype=jnp.float32)
    b = jax.random.uniform(kb, (dout,), minval=-s, maxval=s, dtype=jnp.float32)
    return {"w": w, "b": b}


def init_hgt_layer(key, n_hid, num_types, num_relations, n_heads):
    d_k = n_hid // n_heads
    ks = jax.random.split(key, 10)
    xav = math.sqrt(6.0 / (d_k + d_k))
    return {
        "k_lin": dense_init(ks[0], n_hid, n_hid),
        "q_lin": dense_init(ks[1], n_hid, n_hid),
        "v_lin": dense_init(ks[2], n_hid, n_hid),
        "a_lin": dense_init(ks[3], n_hid, n_hid),
        "ln_g": jnp.ones((1, n_hid), jnp.float32),
        "ln_b": jnp.zeros((1, n_hid), jnp.float32),
        "relation_pri": jnp.ones((num_relations, n_heads), jnp.float32),
        "relation_att": jax.random.uniform(ks[4], (num_relations, n_heads, d_k, d_k),
                                           minval=-xav, maxval=xav, dtype=jnp.float32),
        "relation_msg": jax.random.uniform(ks[5], (num_relations, n_heads, d_k, d_k),
                                           minval=-xav, maxval=xav, dtype=jnp.float32),
        "skip": jnp.ones((num_types,), jnp.float32),
        "w_m": [0.5 * jax.random.normal(ks[6 + i], (num_relations, n_heads, d_k, d_k),
                                        dtype=jnp.float32) for i in range(3)],
    }


def init_hgt(key, n_inps, n_hid, n_out, n_layers, n_heads, num_types, num_relations):
    ks = jax.random.split(key, 6 + n_layers)
    return {
        "adapt_text": dense_init(ks[0], n_inps, n_hid),
        "adapt_img": dense_init(ks[1], n_inps, n_hid),
        "adapt_s": dense_init(ks[2], n_inps, n_hid),
        "predict": dense_init(ks[3], n_hid, n_out),
        "project": dense_init(ks[4], n_hid, 1),
        "layers": [init_hgt_layer(ks[6 + i], n_hid, num_types, num_relations, n_heads)
                   for i in range(n_layers)],
    }


# ---------------------------------------------------------------------------
# Model forward (thin JAX glue + fused Pallas kernels)
# ---------------------------------------------------------------------------
def _block_diag_heads(rel):
    """(H, dk, dk) per-head matrices -> (H*dk, H*dk) block-diagonal matrix."""
    h, dk, _ = rel.shape
    eye = jnp.eye(h, dtype=rel.dtype)
    return jnp.einsum("hij,hg->higj", rel, eye).reshape(h * dk, h * dk)


def hgt_layer_forward(p, h_all, src_idx, dst_idx, rel_id, n_heads, d_k, in_deg,
                      hsum, expand):
    _, n, n_hid = h_all.shape

    # fused k/q/v projection (shared weights across the 3 modalities)
    w_kqv = jnp.concatenate([p["k_lin"]["w"], p["q_lin"]["w"], p["v_lin"]["w"]], axis=1)
    b_kqv = jnp.concatenate([p["k_lin"]["b"], p["q_lin"]["b"], p["v_lin"]["b"]], axis=0)
    kqv = linear_pallas(h_all.reshape(3 * n, n_hid), w_kqv, b_kqv).reshape(3, n, 3 * n_hid)

    # graph plumbing: 2 gathers of the fused projection output (glue)
    src_kv = jnp.take(kqv, src_idx, axis=1)                          # (3, E, 3*n_hid)
    dst_q = jnp.take(kqv[:, :, n_hid:2 * n_hid], dst_idx, axis=1)    # (3, E, n_hid)

    # block-diagonal per-head relation operands (trace-time, tiny)
    wcm = jnp.stack([_block_diag_heads(p["w_m"][m][rel_id]) for m in range(3)], axis=0)
    watt = _block_diag_heads(p["relation_att"][rel_id])
    wmsg = _block_diag_heads(p["relation_msg"][rel_id])
    # fold the reduce-side *10 into the relation prior scale
    pri = (p["relation_pri"][rel_id] * (10.0 / math.sqrt(d_k))).reshape(1, n_heads)
    alpha = jax.nn.sigmoid(p["skip"][0]).reshape(1, 1).astype(jnp.float32)

    new_h, lam = edge_reduce_pallas(
        src_kv, dst_q, h_all, wcm, watt, wmsg, pri, hsum, expand,
        p["a_lin"]["w"], p["a_lin"]["b"].reshape(1, n_hid), p["ln_g"], p["ln_b"], alpha,
        in_deg=in_deg, n_heads=n_heads, d_k=d_k)

    s_img = jnp.mean(lam[1]) + jnp.mean(lam[2])   # etype id == 5 branch of the reference
    return new_h, s_img


def hgt_forward(params, f, f_img, f_s, src_idx, dst_idx, *, n_heads, n_layers,
                rel_id, in_deg):
    n, _ = f.shape
    n_hid = params["adapt_text"]["w"].shape[1]
    d_k = n_hid // n_heads
    bn_scale = 1.0 / math.sqrt(1.0 + 1e-5)   # BatchNorm1d eval, running mean 0 / var 1

    # head-sum / head-expand indicator matrices (shared across layers)
    hsum = jnp.repeat(jnp.eye(n_heads, dtype=jnp.float32), d_k, axis=0)  # (n_hid, H)
    expand = hsum.T                                                      # (H, n_hid)

    # fused adapt (BN scale + linear + tanh) for the 3 modalities
    x3 = jnp.stack([f, f_img, f_s], axis=0)
    w3 = jnp.stack([params["adapt_text"]["w"], params["adapt_img"]["w"],
                    params["adapt_s"]["w"]], axis=0)
    b3 = jnp.stack([params["adapt_text"]["b"], params["adapt_img"]["b"],
                    params["adapt_s"]["b"]], axis=0).reshape(3, 1, n_hid)
    h_all = adapt_pallas(x3, w3, b3, scale=bn_scale)   # (3, N, n_hid)

    s_loss = jnp.float32(0.0)
    for i in range(n_layers):
        h_all, s_img = hgt_layer_forward(params["layers"][i], h_all, src_idx, dst_idx,
                                         rel_id, n_heads, d_k, in_deg, hsum, expand)
        s_loss = s_loss + s_img

    # fused project + softmax + pooling (only the last layer's value is ever used)
    h_pool = pool_pallas(h_all, params["project"]["w"], params["project"]["b"])

    # fused predict heads: one stacked (4N, n_hid) matmul
    pred_in = jnp.concatenate([h_all.reshape(3 * n, n_hid), h_pool], axis=0)
    preds = linear_pallas(pred_in, params["predict"]["w"], params["predict"]["b"])
    text, image, number, out = preds[:n], preds[n:2 * n], preds[2 * n:3 * n], preds[3 * n:]
    return out, text, image, number, s_loss


# ---------------------------------------------------------------------------
if __name__ == "__main__":
    # synthetic heterogeneous graph: 1 node type, 6 declared relations,
    # the single present edge type has id = 5 (so the s_img branch is taken).
    N_NODES, IN_DEG = 8, 4
    N_EDGES = N_NODES * IN_DEG
    N_INPS, N_HID, N_OUT = 16, 32, 4
    N_HEADS, N_LAYERS = 2, 2
    NUM_TYPES, NUM_RELATIONS, REL_ID = 1, 6, 5

    key = jax.random.PRNGKey(0)
    k_par, k_f, k_fi, k_fs, k_src = jax.random.split(key, 5)

    params = init_hgt(k_par, N_INPS, N_HID, N_OUT, N_LAYERS, N_HEADS,
                      NUM_TYPES, NUM_RELATIONS)

    f = jax.random.normal(k_f, (N_NODES, N_INPS), dtype=jnp.float32)
    f_img = jax.random.normal(k_fi, (N_NODES, N_INPS), dtype=jnp.float32)
    f_s = jax.random.normal(k_fs, (N_NODES, N_INPS), dtype=jnp.float32)
    src_idx = jax.random.randint(k_src, (N_EDGES,), 0, N_NODES)
    dst_idx = jnp.arange(N_EDGES, dtype=jnp.int32) // IN_DEG  # in-degree regular, dst-major

    result = hgt_forward(params, f, f_img, f_s, src_idx, dst_idx,
                         n_heads=N_HEADS, n_layers=N_LAYERS,
                         rel_id=REL_ID, in_deg=IN_DEG)
    jax.block_until_ready(result)
    print("KERNEL_OK")
</pallas_src>

<mosaic_0001>
module attributes {stable_mosaic.version = 11 : i64} {
  func.func @_adapt_kernel(%arg0: i32, %arg1: memref<3x8x16xf32, #tpu.memory_space<vmem>>, %arg2: memref<3x16x32xf32, #tpu.memory_space<vmem>>, %arg3: memref<3x1x32xf32, #tpu.memory_space<vmem>>, %arg4: memref<3x8x32xf32, #tpu.memory_space<vmem>>) attributes {dimension_semantics = [#tpu.dimension_semantics<parallel>], iteration_bounds = array<i64: 1>, scalar_prefetch = 0 : i64, scratch_operands = 0 : i64, tpu.core_type = #tpu.core_type<tc>, window_params = [{transform_indices = @transform_0, window_bounds = array<i64: 3, 8, 16>}, {pipeline_mode = #tpu.pipeline_mode<synchronous>, transform_indices = @transform_1, window_bounds = array<i64: 3, 16, 32>}, {pipeline_mode = #tpu.pipeline_mode<synchronous>, transform_indices = @transform_2, window_bounds = array<i64: 3, 1, 32>}, {transform_indices = @transform_3, window_bounds = array<i64: 3, 8, 32>}]} {
    %c0 = arith.constant 0 : index
    %c0_0 = arith.constant 0 : index
    %c0_1 = arith.constant 0 : index
    %0 = vector.load %arg1[%c0, %c0_0, %c0_1] : memref<3x8x16xf32, #tpu.memory_space<vmem>>, vector<1x8x16xf32>
    %1 = vector.shape_cast %0 : vector<1x8x16xf32> to vector<8x16xf32>
    %cst = arith.constant 0.999994993 : f32
    %2 = vector.broadcast %cst : f32 to vector<8x16xf32>
    %3 = arith.mulf %1, %2 : vector<8x16xf32>
    %c0_2 = arith.constant 0 : index
    %c0_3 = arith.constant 0 : index
    %c0_4 = arith.constant 0 : index
    %4 = vector.load %arg2[%c0_2, %c0_3, %c0_4] : memref<3x16x32xf32, #tpu.memory_space<vmem>>, vector<1x16x32xf32>
    %5 = vector.shape_cast %4 : vector<1x16x32xf32> to vector<16x32xf32>
    %cst_5 = arith.constant dense<0.000000e+00> : vector<8x32xf32>
    %6 = tpu.matmul %3, %5, %cst_5 {dimension_numbers = #tpu.dot_dimension_numbers<[1], [0], [0], [1], [0, 0, 1, 1], [], []>} : vector<8x16xf32>, vector<16x32xf32>, vector<8x32xf32> -> vector<8x32xf32>
    %c0_6 = arith.constant 0 : index
    %c0_7 = arith.constant 0 : index
    %c0_8 = arith.constant 0 : index
    %7 = vector.load %arg3[%c0_6, %c0_7, %c0_8] : memref<3x1x32xf32, #tpu.memory_space<vmem>>, vector<1x1x32xf32>
    %8 = vector.shape_cast %7 : vector<1x1x32xf32> to vector<1x32xf32>
    %9 = vector.broadcast %8 : vector<1x32xf32> to vector<8x32xf32>
    %10 = arith.addf %6, %9 : vector<8x32xf32>
    %11 = math.tanh %10 : vector<8x32xf32>
    %c0_9 = arith.constant 0 : index
    %c0_10 = arith.constant 0 : index
    %c0_11 = arith.constant 0 : index
    %12 = vector.load %arg4[%c0_9, %c0_10, %c0_11] : memref<3x8x32xf32, #tpu.memory_space<vmem>>, vector<1x8x32xf32>
    %13 = vector.shape_cast %12 : vector<1x8x32xf32> to vector<8x32xf32>
    %14 = vector.shape_cast %11 : vector<8x32xf32> to vector<1x8x32xf32>
    tpu.vector_store %arg4[%c0_9, %c0_10, %c0_11], %14 {strides = array<i32>} : memref<3x8x32xf32, #tpu.memory_space<vmem>>, vector<1x8x32xf32>,
    %c1 = arith.constant 1 : index
    %c0_12 = arith.constant 0 : index
    %c0_13 = arith.constant 0 : index
    %15 = vector.load %arg1[%c1, %c0_12, %c0_13] : memref<3x8x16xf32, #tpu.memory_space<vmem>>, vector<1x8x16xf32>
    %16 = vector.shape_cast %15 : vector<1x8x16xf32> to vector<8x16xf32>
    %cst_14 = arith.constant 0.999994993 : f32
    %17 = vector.broadcast %cst_14 : f32 to vector<8x16xf32>
    %18 = arith.mulf %16, %17 : vector<8x16xf32>
    %c1_15 = arith.constant 1 : index
    %c0_16 = arith.constant 0 : index
    %c0_17 = arith.constant 0 : index
    %19 = vector.load %arg2[%c1_15, %c0_16, %c0_17] : memref<3x16x32xf32, #tpu.memory_space<vmem>>, vector<1x16x32xf32>
    %20 = vector.shape_cast %19 : vector<1x16x32xf32> to vector<16x32xf32>
    %cst_18 = arith.constant dense<0.000000e+00> : vector<8x32xf32>
    %21 = tpu.matmul %18, %20, %cst_18 {dimension_numbers = #tpu.dot_dimension_numbers<[1], [0], [0], [1], [0, 0, 1, 1], [], []>} : vector<8x16xf32>, vector<16x32xf32>, vector<8x32xf32> -> vector<8x32xf32>
    %c1_19 = arith.constant 1 : index
    %c0_20 = arith.constant 0 : index
    %c0_21 = arith.constant 0 : index
    %22 = vector.load %arg3[%c1_19, %c0_20, %c0_21] : memref<3x1x32xf32, #tpu.memory_space<vmem>>, vector<1x1x32xf32>
    %23 = vector.shape_cast %22 : vector<1x1x32xf32> to vector<1x32xf32>
    %24 = vector.broadcast %23 : vector<1x32xf32> to vector<8x32xf32>
    %25 = arith.addf %21, %24 : vector<8x32xf32>
    %26 = math.tanh %25 : vector<8x32xf32>
    %c1_22 = arith.constant 1 : index
    %c0_23 = arith.constant 0 : index
    %c0_24 = arith.constant 0 : index
    %27 = vector.load %arg4[%c1_22, %c0_23, %c0_24] : memref<3x8x32xf32, #tpu.memory_space<vmem>>, vector<1x8x32xf32>
    %28 = vector.shape_cast %27 : vector<1x8x32xf32> to vector<8x32xf32>
    %29 = vector.shape_cast %26 : vector<8x32xf32> to vector<1x8x32xf32>
    tpu.vector_store %arg4[%c1_22, %c0_23, %c0_24], %29 {strides = array<i32>} : memref<3x8x32xf32, #tpu.memory_space<vmem>>, vector<1x8x32xf32>,
    %c2 = arith.constant 2 : index
    %c0_25 = arith.constant 0 : index
    %c0_26 = arith.constant 0 : index
    %30 = vector.load %arg1[%c2, %c0_25, %c0_26] : memref<3x8x16xf32, #tpu.memory_space<vmem>>, vector<1x8x16xf32>
    %31 = vector.shape_cast %30 : vector<1x8x16xf32> to vector<8x16xf32>
    %cst_27 = arith.constant 0.999994993 : f32
    %32 = vector.broadcast %cst_27 : f32 to vector<8x16xf32>
    %33 = arith.mulf %31, %32 : vector<8x16xf32>
    %c2_28 = arith.constant 2 : index
    %c0_29 = arith.constant 0 : index
    %c0_30 = arith.constant 0 : index
    %34 = vector.load %arg2[%c2_28, %c0_29, %c0_30] : memref<3x16x32xf32, #tpu.memory_space<vmem>>, vector<1x16x32xf32>
    %35 = vector.shape_cast %34 : vector<1x16x32xf32> to vector<16x32xf32>
    %cst_31 = arith.constant dense<0.000000e+00> : vector<8x32xf32>
    %36 = tpu.matmul %33, %35, %cst_31 {dimension_numbers = #tpu.dot_dimension_numbers<[1], [0], [0], [1], [0, 0, 1, 1], [], []>} : vector<8x16xf32>, vector<16x32xf32>, vector<8x32xf32> -> vector<8x32xf32>
    %c2_32 = arith.constant 2 : index
    %c0_33 = arith.constant 0 : index
    %c0_34 = arith.constant 0 : index
    %37 = vector.load %arg3[%c2_32, %c0_33, %c0_34] : memref<3x1x32xf32, #tpu.memory_space<vmem>>, vector<1x1x32xf32>
    %38 = vector.shape_cast %37 : vector<1x1x32xf32> to vector<1x32xf32>
    %39 = vector.broadcast %38 : vector<1x32xf32> to vector<8x32xf32>
    %40 = arith.addf %36, %39 : vector<8x32xf32>
    %41 = math.tanh %40 : vector<8x32xf32>
    %c2_35 = arith.constant 2 : index
    %c0_36 = arith.constant 0 : index
    %c0_37 = arith.constant 0 : index
    %42 = vector.load %arg4[%c2_35, %c0_36, %c0_37] : memref<3x8x32xf32, #tpu.memory_space<vmem>>, vector<1x8x32xf32>
    %43 = vector.shape_cast %42 : vector<1x8x32xf32> to vector<8x32xf32>
    %44 = vector.shape_cast %41 : vector<8x32xf32> to vector<1x8x32xf32>
    tpu.vector_store %arg4[%c2_35, %c0_36, %c0_37], %44 {strides = array<i32>} : memref<3x8x32xf32, #tpu.memory_space<vmem>>, vector<1x8x32xf32>,
    return
  }
  func.func @transform_0(%arg0: i32) -> (i32, i32, i32) {
    %c0_i32 = arith.constant 0 : i32
    %c0_i32_0 = arith.constant 0 : i32
    %c0_i32_1 = arith.constant 0 : i32
    return %c0_i32, %arg0, %c0_i32_0 : i32, i32, i32
  }
  func.func @transform_1(%arg0: i32) -> (i32, i32, i32) {
    %c0_i32 = arith.constant 0 : i32
    %c0_i32_0 = arith.constant 0 : i32
    %c0_i32_1 = arith.constant 0 : i32
    %c0_i32_2 = arith.constant 0 : i32
    return %c0_i32, %c0_i32_0, %c0_i32_1 : i32, i32, i32
  }
  func.func @transform_2(%arg0: i32) -> (i32, i32, i32) {
    %c0_i32 = arith.constant 0 : i32
    %c0_i32_0 = arith.constant 0 : i32
    %c0_i32_1 = arith.constant 0 : i32
    %c0_i32_2 = arith.constant 0 : i32
    return %c0_i32, %c0_i32_0, %c0_i32_1 : i32, i32, i32
  }
  func.func @transform_3(%arg0: i32) -> (i32, i32, i32) {
    %c0_i32 = arith.constant 0 : i32
    %c0_i32_0 = arith.constant 0 : i32
    %c0_i32_1 = arith.constant 0 : i32
    return %c0_i32, %arg0, %c0_i32_0 : i32, i32, i32
  }
}

</mosaic_0001>

<llo_original>
// kernel: tpu_custom_call.1
$region0: #{tpu_custom_call.1}
  #allocation0 [shape = 'u32[]', space=smem, size = 0x4, offset = 0x4, fixed_abs, tag = 'smem constant byte address 0x4 - core index']
  #allocation1 [shape = 'u32[144,128]{1,0:T(1,128)}', space=vmem, size = 0x12000, scoped, tag = 'internal scratch']
  %s0 = inlined_call_operand.hbm [shape: f32[3,8,16], index: 0, kind: input, shape index: {}]
  %s1 = inlined_call_operand.hbm [shape: f32[3,16,32], index: 1, kind: input, shape index: {}]
  %s2 = inlined_call_operand.vmem [shape: f32[3,1,32], index: 2, kind: input, shape index: {}]
  %s3 = inlined_call_operand.hbm [shape: f32[3,8,32], index: 3, kind: output, shape index: {}]
  %s4 = sld [smem:[#allocation0]]
  $region30: #{tpu_custom_call.1} parent=0
    _
  %s6 = ssub.s32 1, %s4
  %s7 = scalar_select 0, %s6, %s4
  $region1: #{tpu_custom_call.1} parent=0
    #allocation2 [shape = 'u8[12288]{0}', space=vmem, size = 0x3000, scoped, tag = 'input window, operand 0, single buffered']
    #allocation3 [shape = 's32[1]{0}', space=sflag, size = 0x4, scoped, tag = 'scoped memory for tpu_custom_call.1']
    #allocation4 [shape = 's32[1]{0}', space=sflag, size = 0x4, scoped, tag = 'scoped memory for tpu_custom_call.1']
    #allocation5 [shape = 'u8[24576]{0}', space=vmem, size = 0x6000, scoped, tag = 'input window, operand 1, single buffered']
    #allocation6 [shape = 's32[1]{0}', space=sflag, size = 0x4, scoped, tag = 'scoped memory for tpu_custom_call.1']
    #allocation7 [shape = 'u8[12288]{0}', space=vmem, size = 0x3000, scoped, tag = 'output window, operand 0, single buffered']
    %8 = vsyncpa [#allocation3], 0
    %9 = vsyncpa [#allocation6], 0
    %10 = vsyncpa [#allocation4], 0
    // Predicated region
    $region2: #{tpu_custom_call.1} parent=1 // pred_check
      _
    $region3: #{tpu_custom_call.1} parent=1 // pred_check_branch
      %12 = sbr.rel (0) target = $region5
    $region4: #{tpu_custom_call.1} parent=1 // pred_region
      %s14 = ssub.s32 384, 384
      %15 = vsyncadd [#allocation3], %s14
      %s16 = sshll.u32 [#allocation2], 4
      %s17 = int_to_ptr.vmem [resolvable:$true] %s16
      %22 = dma.hbm_to_vmem [thread:$0]  %s0, 384, %s17, [#allocation3], 128, 128, 8
    $region5: #{tpu_custom_call.1} parent=1 // pred_fallthru
      _
    // Predicated region
    $region6: #{tpu_custom_call.1} parent=1 // pred_check
      _
    $region7: #{tpu_custom_call.1} parent=1 // pred_check_branch
      %24 = sbr.rel (0) target = $region9
    $region8: #{tpu_custom_call.1} parent=1 // pred_region
      %s26 = ssub.s32 768, 768
      %27 = vsyncadd [#allocation6], %s26
      %s28 = sshll.u32 [#allocation5], 4
      %s29 = int_to_ptr.vmem [resolvable:$true] %s28
      %34 = dma.hbm_to_vmem [thread:$0]  %s1, 768, %s29, [#allocation6], 128, 128, 8
    $region9: #{tpu_custom_call.1} parent=1 // pred_fallthru
      _
    // Predicated region
    $region10: #{tpu_custom_call.1} parent=1 // pred_check
      _
    $region11: #{tpu_custom_call.1} parent=1 // pred_check_branch
      %36 = sbr.rel (0) target = $region13
    $region12: #{tpu_custom_call.1} parent=1 // pred_region
      _
    $region13: #{tpu_custom_call.1} parent=1 // pred_fallthru
      _
    // Predicated region
    $region14: #{tpu_custom_call.1} parent=1 // pred_check
      _
    $region15: #{tpu_custom_call.1} parent=1 // pred_check_branch
      %38 = sbr.rel (0) target = $region17
    $region16: #{tpu_custom_call.1} parent=1 // pred_region
      %39 = dma.done [#allocation3], 384
    $region17: #{tpu_custom_call.1} parent=1 // pred_fallthru
      _
    // Predicated region
    $region18: #{tpu_custom_call.1} parent=1 // pred_check
      _
    $region19: #{tpu_custom_call.1} parent=1 // pred_check_branch
      %41 = sbr.rel (0) target = $region21
    $region20: #{tpu_custom_call.1} parent=1 // pred_region
      %42 = dma.done [#allocation6], 768
    $region21: #{tpu_custom_call.1} parent=1 // pred_fallthru
      _
    %v43 = vld [vmem:[#allocation2] sm:$0xff]
    %v44 = vmul.f32 %v43, 0.999995
    %v45 = vld [vmem:[#allocation5] sm:$0xff]
    %v46 = vld [vmem:[#allocation5 + $0x8] sm:$0xff]
    %v47 = vld [vmem:[%s2] sm:$0x1]
    %v49 = vlaneseq
    %v50 = vshrl.u32 %v49, 7
    %v51 = vsub.s32 0, %v50
    %v52 = vrot.slane %v47, %v51
    %vm54 = vcmask 130048
    %v56 = vsel %vm54, %v44, 0
    %58 = vmatprep.subr.mxu0 0.0
    %59 = vmatpush1.msra.mxu0 %v45
    %60 = vmatprep.subr.mxu0 0.0
    %61 = vmatpush1.msra.mxu0 %v46
    %62 = vmatprep.subr.mxu0 0.0
    %63 = vmatpush1.msra.mxu0 0.0
    %64 = vmatprep.subr.mxu0 0.0
    %65 = vmatpush1.msra.mxu0 0.0
    %66 = vmatprep.subr.mxu0 0.0
    %67 = vmatpush1.msra.mxu0 0.0
    %68 = vmatprep.subr.mxu0 0.0
    %69 = vmatpush1.msra.mxu0 0.0
    %70 = vmatprep.subr.mxu0 0.0
    %71 = vmatpush1.msra.mxu0 0.0
    %72 = vmatprep.subr.mxu0 0.0
    %73 = vmatpush1.msra.mxu0 0.0
    %74 = vmatprep.subr.mxu0 0.0
    %75 = vmatpush1.msra.mxu0 0.0
    %76 = vmatprep.subr.mxu0 0.0
    %77 = vmatpush1.msra.mxu0 0.0
    %78 = vmatprep.subr.mxu0 0.0
    %79 = vmatpush1.msra.mxu0 0.0
    %80 = vmatprep.subr.mxu0 0.0
    %81 = vmatpush1.msra.mxu0 0.0
    %82 = vmatprep.subr.mxu0 0.0
    %83 = vmatpush1.msra.mxu0 0.0
    %84 = vmatprep.subr.mxu0 0.0
    %85 = vmatpush1.msra.mxu0 0.0
    %86 = vmatprep.subr.mxu0 0.0
    %87 = vmatpush1.msra.mxu0 0.0
    %88 = vmatprep.subr.mxu0 0.0
    %89 = vmatpush1.msra.mxu0 0.0
    %90 = vmatprep.subr.mxu0 0.0
    %91 = vmatpush1.msra.mxu0 0.0
    %92 = vmatprep.subr.mxu0 0.0
    %93 = vmatpush1.msra.mxu0 0.0
    %94 = vmatprep.subr.mxu0 0.0
    %95 = vmatpush1.msra.mxu0 0.0
    %96 = vmatprep.subr.mxu0 0.0
    %97 = vmatpush1.msra.mxu0 0.0
    %98 = vmatprep.subr.mxu0 0.0
    %99 = vmatpush1.msra.mxu0 0.0
    %100 = vmatprep.subr.mxu0 0.0
    %101 = vmatpush1.msra.mxu0 0.0
    %102 = vmatprep.subr.mxu0 0.0
    %103 = vmatpush1.msra.mxu0 0.0
    %104 = vmatprep.subr.mxu0 0.0
    %105 = vmatpush1.msra.mxu0 0.0
    %106 = vmatprep.subr.mxu0 0.0
    %107 = vmatpush1.msra.mxu0 0.0
    %108 = vmatprep.subr.mxu0 0.0
    %109 = vmatpush1.msra.mxu0 0.0
    %110 = vmatprep.subr.mxu0 0.0
    %111 = vmatpush1.msra.mxu0 0.0
    %112 = vmatprep.subr.mxu0 0.0
    %113 = vmatpush1.msra.mxu0 0.0
    %114 = vmatprep.subr.mxu0 0.0
    %115 = vmatpush1.msra.mxu0 0.0
    %116 = vmatprep.subr.mxu0 0.0
    %117 = vmatpush1.msra.mxu0 0.0
    %118 = vmatprep.subr.mxu0 0.0
    %119 = vmatpush1.msra.mxu0 0.0
    %120 = vmatprep.subr.mxu0 0.0
    %121 = vmatpush1.msra.mxu0 0.0
    %122 = vmatprep.mubr.f32.mxu0 0.0
    %123 = vmatmul.mubr.f32.gmra.mrb[0].mxu0 %v56
    %v124 = vpop.f32.mrb[0].mxu0
    %v125 = vadd.f32 %v52, %v124
    %v126 = vpop.f32.mrb[0].mxu0
    %127 = vdwg.mxu0
    %v128 = vtanh.pop %v125
    %vm129 = vcmask 261120
    %130 = vst.msk [vmem:[#allocation7] sm:$0xff] %vm129, %v128
    %s131 = scalar_lea.vmem [#allocation2], 8
    %v132 = vld [vmem:[%s131] sm:$0xff]
    %v133 = vmul.f32 %v132, 0.999995
    %s134 = scalar_lea.vmem [#allocation5], 16
    %v135 = vld [vmem:[%s134] sm:$0xff]
    %v136 = vld [vmem:[%s134 + $0x8] sm:$0xff]
    %s137 = scalar_lea.vmem %s2, 1
    %v138 = vld [vmem:[%s137] sm:$0x1]
    %v140 = vlaneseq
    %v141 = vshrl.u32 %v140, 7
    %v142 = vsub.s32 0, %v141
    %v143 = vrot.slane %v138, %v142
    %v146 = vsel %vm54, %v133, 0
    %148 = vmatprep.subr.mxu0 0.0
    %149 = vmatpush1.msra.mxu0 %v135
    %150 = vmatprep.subr.mxu0 0.0
    %151 = vmatpush1.msra.mxu0 %v136
    %152 = vmatprep.subr.mxu0 0.0
    %153 = vmatpush1.msra.mxu0 0.0
    %154 = vmatprep.subr.mxu0 0.0
    %155 = vmatpush1.msra.mxu0 0.0
    %156 = vmatprep.subr.mxu0 0.0
    %157 = vmatpush1.msra.mxu0 0.0
    %158 = vmatprep.subr.mxu0 0.0
    %159 = vmatpush1.msra.mxu0 0.0
    %160 = vmatprep.subr.mxu0 0.0
    %161 = vmatpush1.msra.mxu0 0.0
    %162 = vmatprep.subr.mxu0 0.0
    %163 = vmatpush1.msra.mxu0 0.0
    %164 = vmatprep.subr.mxu0 0.0
    %165 = vmatpush1.msra.mxu0 0.0
    %166 = vmatprep.subr.mxu0 0.0
    %167 = vmatpush1.msra.mxu0 0.0
    %168 = vmatprep.subr.mxu0 0.0
    %169 = vmatpush1.msra.mxu0 0.0
    %170 = vmatprep.subr.mxu0 0.0
    %171 = vmatpush1.msra.mxu0 0.0
    %172 = vmatprep.subr.mxu0 0.0
    %173 = vmatpush1.msra.mxu0 0.0
    %174 = vmatprep.subr.mxu0 0.0
    %175 = vmatpush1.msra.mxu0 0.0
    %176 = vmatprep.subr.mxu0 0.0
    %177 = vmatpush1.msra.mxu0 0.0
    %178 = vmatprep.subr.mxu0 0.0
    %179 = vmatpush1.msra.mxu0 0.0
    %180 = vmatprep.subr.mxu0 0.0
    %181 = vmatpush1.msra.mxu0 0.0
    %182 = vmatprep.subr.mxu0 0.0
    %183 = vmatpush1.msra.mxu0 0.0
    %184 = vmatprep.subr.mxu0 0.0
    %185 = vmatpush1.msra.mxu0 0.0
    %186 = vmatprep.subr.mxu0 0.0
    %187 = vmatpush1.msra.mxu0 0.0
    %188 = vmatprep.subr.mxu0 0.0
    %189 = vmatpush1.msra.mxu0 0.0
    %190 = vmatprep.subr.mxu0 0.0
    %191 = vmatpush1.msra.mxu0 0.0
    %192 = vmatprep.subr.mxu0 0.0
    %193 = vmatpush1.msra.mxu0 0.0
    %194 = vmatprep.subr.mxu0 0.0
    %195 = vmatpush1.msra.mxu0 0.0
    %196 = vmatprep.subr.mxu0 0.0
    %197 = vmatpush1.msra.mxu0 0.0
    %198 = vmatprep.subr.mxu0 0.0
    %199 = vmatpush1.msra.mxu0 0.0
    %200 = vmatprep.subr.mxu0 0.0
    %201 = vmatpush1.msra.mxu0 0.0
    %202 = vmatprep.subr.mxu0 0.0
    %203 = vmatpush1.msra.mxu0 0.0
    %204 = vmatprep.subr.mxu0 0.0
    %205 = vmatpush1.msra.mxu0 0.0
    %206 = vmatprep.subr.mxu0 0.0
    %207 = vmatpush1.msra.mxu0 0.0
    %208 = vmatprep.subr.mxu0 0.0
    %209 = vmatpush1.msra.mxu0 0.0
    %210 = vmatprep.subr.mxu0 0.0
    %211 = vmatpush1.msra.mxu0 0.0
    %212 = vmatprep.mubr.f32.mxu0 0.0
    %213 = vmatmul.mubr.f32.gmra.mrb[0].mxu0 %v146
    %v214 = vpop.f32.mrb[0].mxu0
    %v215 = vadd.f32 %v143, %v214
    %v216 = vpop.f32.mrb[0].mxu0
    %217 = vdwg.mxu0
    %v218 = vtanh.pop %v215
    %s219 = scalar_lea.vmem [#allocation7], 8
    %220 = vst.msk [vmem:[%s219] sm:$0xff] %vm129, %v218
    %s221 = scalar_lea.vmem [#allocation2], 16
    %v222 = vld [vmem:[%s221] sm:$0xff]
    %v223 = vmul.f32 %v222, 0.999995
    %s224 = scalar_lea.vmem [#allocation5], 32
    %v225 = vld [vmem:[%s224] sm:$0xff]
    %v226 = vld [vmem:[%s224 + $0x8] sm:$0xff]
    %s227 = scalar_lea.vmem %s2, 2
    %v228 = vld [vmem:[%s227] sm:$0x1]
    %v230 = vlaneseq
    %v231 = vshrl.u32 %v230, 7
    %v232 = vsub.s32 0, %v231
    %v233 = vrot.slane %v228, %v232
    %v236 = vsel %vm54, %v223, 0
    %238 = vmatprep.subr.mxu0 0.0
    %239 = vmatpush1.msra.mxu0 %v225
    %240 = vmatprep.subr.mxu0 0.0
    %241 = vmatpush1.msra.mxu0 %v226
    %242 = vmatprep.subr.mxu0 0.0
    %243 = vmatpush1.msra.mxu0 0.0
    %244 = vmatprep.subr.mxu0 0.0
    %245 = vmatpush1.msra.mxu0 0.0
    %246 = vmatprep.subr.mxu0 0.0
    %247 = vmatpush1.msra.mxu0 0.0
    %248 = vmatprep.subr.mxu0 0.0
    %249 = vmatpush1.msra.mxu0 0.0
    %250 = vmatprep.subr.mxu0 0.0
    %251 = vmatpush1.msra.mxu0 0.0
    %252 = vmatprep.subr.mxu0 0.0
    %253 = vmatpush1.msra.mxu0 0.0
    %254 = vmatprep.subr.mxu0 0.0
    %255 = vmatpush1.msra.mxu0 0.0
    %256 = vmatprep.subr.mxu0 0.0
    %257 = vmatpush1.msra.mxu0 0.0
    %258 = vmatprep.subr.mxu0 0.0
    %259 = vmatpush1.msra.mxu0 0.0
    %260 = vmatprep.subr.mxu0 0.0
    %261 = vmatpush1.msra.mxu0 0.0
    %262 = vmatprep.subr.mxu0 0.0
    %263 = vmatpush1.msra.mxu0 0.0
    %264 = vmatprep.subr.mxu0 0.0
    %265 = vmatpush1.msra.mxu0 0.0
    %266 = vmatprep.subr.mxu0 0.0
    %267 = vmatpush1.msra.mxu0 0.0
    %268 = vmatprep.subr.mxu0 0.0
    %269 = vmatpush1.msra.mxu0 0.0
    %270 = vmatprep.subr.mxu0 0.0
    %271 = vmatpush1.msra.mxu0 0.0
    %272 = vmatprep.subr.mxu0 0.0
    %273 = vmatpush1.msra.mxu0 0.0
    %274 = vmatprep.subr.mxu0 0.0
    %275 = vmatpush1.msra.mxu0 0.0
    %276 = vmatprep.subr.mxu0 0.0
    %277 = vmatpush1.msra.mxu0 0.0
    %278 = vmatprep.subr.mxu0 0.0
    %279 = vmatpush1.msra.mxu0 0.0
    %280 = vmatprep.subr.mxu0 0.0
    %281 = vmatpush1.msra.mxu0 0.0
    %282 = vmatprep.subr.mxu0 0.0
    %283 = vmatpush1.msra.mxu0 0.0
    %284 = vmatprep.subr.mxu0 0.0
    %285 = vmatpush1.msra.mxu0 0.0
    %286 = vmatprep.subr.mxu0 0.0
    %287 = vmatpush1.msra.mxu0 0.0
    %288 = vmatprep.subr.mxu0 0.0
    %289 = vmatpush1.msra.mxu0 0.0
    %290 = vmatprep.subr.mxu0 0.0
    %291 = vmatpush1.msra.mxu0 0.0
    %292 = vmatprep.subr.mxu0 0.0
    %293 = vmatpush1.msra.mxu0 0.0
    %294 = vmatprep.subr.mxu0 0.0
    %295 = vmatpush1.msra.mxu0 0.0
    %296 = vmatprep.subr.mxu0 0.0
    %297 = vmatpush1.msra.mxu0 0.0
    %298 = vmatprep.subr.mxu0 0.0
    %299 = vmatpush1.msra.mxu0 0.0
    %300 = vmatprep.subr.mxu0 0.0
    %301 = vmatpush1.msra.mxu0 0.0
    %302 = vmatprep.mubr.f32.mxu0 0.0
    %303 = vmatmul.mubr.f32.gmra.mrb[0].mxu0 %v236
    %v304 = vpop.f32.mrb[0].mxu0
    %v305 = vadd.f32 %v233, %v304
    %v306 = vpop.f32.mrb[0].mxu0
    %307 = vdwg.mxu0
    %v308 = vtanh.pop %v305
    %s309 = scalar_lea.vmem [#allocation7], 16
    %310 = vst.msk [vmem:[%s309] sm:$0xff] %vm129, %v308
    // Predicated region
    $region22: #{tpu_custom_call.1} parent=1 // pred_check
      _
    $region23: #{tpu_custom_call.1} parent=1 // pred_check_branch
      %312 = sbr.rel (0) target = $region25
    $region24: #{tpu_custom_call.1} parent=1 // pred_region
      %s314 = ssub.s32 384, 384
      %315 = vsyncadd [#allocation4], %s314
      %s316 = sshll.u32 [#allocation7], 4
      %s317 = int_to_ptr.vmem [resolvable:$true] %s316
      %322 = dma.vmem_to_hbm [thread:$0]  %s317, 384, %s3, [#allocation4], 128, 128, 8
    $region25: #{tpu_custom_call.1} parent=1 // pred_fallthru
      _
    // Predicated region
    $region26: #{tpu_custom_call.1} parent=1 // pred_check
      _
    $region27: #{tpu_custom_call.1} parent=1 // pred_check_branch
      %324 = sbr.rel (0) target = $region29
    $region28: #{tpu_custom_call.1} parent=1 // pred_region
      %325 = dma.done [#allocation4], 384
    $region29: #{tpu_custom_call.1} parent=1 // pred_fallthru
      _
    %326 = vsyncpa [#allocation3], 1
    %327 = vsyncpa [#allocation6], 1
    %328 = vsyncpa [#allocation4], 1

</llo_original>
